<compile_context>
chip_gen: v5e
topology: v5e:2x2
jax: 0.10.0
libtpu: 0.0.40
codegen_flags: <defaults>
</compile_context>

<pallas_src>
import functools
import math

import jax
import jax.numpy as jnp
from jax.experimental import pallas as pl
from jax.experimental.pallas import tpu as pltpu


# ----------------------------------------------------------------------------
# Tiling / VMEM helpers
# ----------------------------------------------------------------------------

def _vmem_limit_bytes():
    cap = 0
    try:
        cap = int(pltpu.get_tpu_info().vmem_capacity_bytes)
    except Exception:
        cap = 0
    if cap <= 0:
        cap = 64 * 1024 * 1024
    # 3/4 of physical, capped at 96 MiB, floor at the 32 MiB default.
    return max(32 * 1024 * 1024, min((cap * 3) // 4, 96 * 1024 * 1024))


_VMEM_LIMIT = _vmem_limit_bytes()


def _pick_row_tile(m, target=512):
    """Largest power-of-two row tile <= target dividing m, keeping >=2 grid steps
    on the parallel axis when possible (v7x has 2 TensorCores)."""
    if m >= 16:
        target = min(target, m // 2)
    for t in (1024, 512, 256, 128, 64, 32, 16, 8):
        if t <= target and m % t == 0:
            return t
    return m


def _pick_ff_tile(d_ff, target=512):
    """d_ff chunk: 256-aligned where possible (v6e/v7x MXU is 2x256x256)."""
    for t in (2048, 1024, 512, 256, 128):
        if t <= target and d_ff % t == 0:
            return t
    return d_ff


# ----------------------------------------------------------------------------
# Kernels
# ----------------------------------------------------------------------------

def linear_kernel(x_ref, w_ref, b_ref, o_ref):
    # bf16 MXU matmul, f32 accumulation; bias add in f32, single downcast.
    y = jnp.dot(x_ref[...].astype(w_ref.dtype), w_ref[...],
                preferred_element_type=jnp.float32)
    o_ref[...] = (y + b_ref[...]).astype(o_ref.dtype)


def attn_kernel(q_ref, k_ref, v_ref, m_ref, o_ref, *, sm_scale):
    # One (batch*head) per grid step; full (S_q, S_k) attention (S is small here).
    q = q_ref[0].astype(jnp.float32)
    k = k_ref[0].astype(jnp.float32)
    v = v_ref[0].astype(jnp.float32)
    s = jax.lax.dot_general(q, k, (((1,), (1,)), ((), ())),
                            preferred_element_type=jnp.float32) * sm_scale
    s = jnp.where(m_ref[0] == 0, -1e9, s)
    s = s - jnp.max(s, axis=-1, keepdims=True)
    p = jnp.exp(s)
    p = p / jnp.sum(p, axis=-1, keepdims=True)
    o_ref[0] = jnp.dot(p, v, preferred_element_type=jnp.float32).astype(o_ref.dtype)


def ffn_kernel(x_ref, w1_ref, b1_ref, w2_ref, b2_ref, o_ref, acc_ref):
    # Grid: (M tiles, d_ff chunks).  d_ff axis is the reduction ("arbitrary") axis.
    k = pl.program_id(1)

    @pl.when(k == 0)
    def _():
        acc_ref[...] = jnp.zeros_like(acc_ref)

    x = x_ref[...].astype(w1_ref.dtype)                       # bf16 LHS
    h = jnp.dot(x, w1_ref[...], preferred_element_type=jnp.float32)
    h = jnp.maximum(h + b1_ref[...], 0.0)                     # bias + ReLU in f32
    acc_ref[...] += jnp.dot(h.astype(w2_ref.dtype), w2_ref[...],
                            preferred_element_type=jnp.float32)

    @pl.when(k == pl.num_programs(1) - 1)
    def _():
        o_ref[...] = (acc_ref[...] + b2_ref[...]).astype(o_ref.dtype)


def add_ln_kernel(x_ref, y_ref, g_ref, b_ref, o_ref, *, eps):
    # LayerNorm(x + y), all statistics in f32.
    z = x_ref[...].astype(jnp.float32) + y_ref[...].astype(jnp.float32)
    mu = jnp.mean(z, axis=-1, keepdims=True)
    zc = z - mu
    var = jnp.mean(zc * zc, axis=-1, keepdims=True)
    zn = zc * jax.lax.rsqrt(var + eps)
    o_ref[...] = (zn * g_ref[...] + b_ref[...]).astype(o_ref.dtype)


# ----------------------------------------------------------------------------
# Pallas wrappers
# ----------------------------------------------------------------------------

def linear(x2d, w, b, *, tm=None):
    """x2d: [M, d_in]; w: [d_in, d_out] (bf16); b: [d_out] (f32) -> [M, d_out]."""
    M, d_in = x2d.shape
    d_out = w.shape[1]
    tm = _pick_row_tile(M) if tm is None else tm
    assert M % tm == 0

    flops = 2 * M * d_in * d_out
    bytes_accessed = int(x2d.size * x2d.dtype.itemsize
                         + w.size * w.dtype.itemsize
                         + b.size * b.dtype.itemsize
                         + M * d_out * x2d.dtype.itemsize)

    return pl.pallas_call(
        linear_kernel,
        out_shape=jax.ShapeDtypeStruct((M, d_out), x2d.dtype),
        grid_spec=pltpu.PrefetchScalarGridSpec(
            num_scalar_prefetch=0,
            grid=(M // tm,),
            in_specs=[
                pl.BlockSpec((tm, d_in), lambda i: (i, 0)),
                pl.BlockSpec((d_in, d_out), lambda i: (0, 0)),   # resident weight
                pl.BlockSpec((1, d_out), lambda i: (0, 0)),
            ],
            out_specs=pl.BlockSpec((tm, d_out), lambda i: (i, 0)),
        ),
        compiler_params=pltpu.CompilerParams(
            dimension_semantics=("parallel",),
            vmem_limit_bytes=_VMEM_LIMIT),
        cost_estimate=pl.CostEstimate(flops=flops, transcendentals=0,
                                      bytes_accessed=bytes_accessed),
    )(x2d, w, b.reshape(1, d_out))


def fused_attention(qh, kh, vh, mh, *, sm_scale):
    """qh: [B*H, S_q, d_k]; kh/vh: [B*H, S_k, d_k]; mh: [B*H, S_q, S_k] (1=keep)."""
    BH, S_q, d_k = qh.shape
    S_k = kh.shape[1]
    kernel = functools.partial(attn_kernel, sm_scale=sm_scale)
    return pl.pallas_call(
        kernel,
        out_shape=jax.ShapeDtypeStruct((BH, S_q, d_k), qh.dtype),
        grid_spec=pltpu.PrefetchScalarGridSpec(
            num_scalar_prefetch=0,
            grid=(BH,),
            in_specs=[
                pl.BlockSpec((1, S_q, d_k), lambda i: (i, 0, 0)),
                pl.BlockSpec((1, S_k, d_k), lambda i: (i, 0, 0)),
                pl.BlockSpec((1, S_k, d_k), lambda i: (i, 0, 0)),
                pl.BlockSpec((1, S_q, S_k), lambda i: (i, 0, 0)),
            ],
            out_specs=pl.BlockSpec((1, S_q, d_k), lambda i: (i, 0, 0)),
        ),
        compiler_params=pltpu.CompilerParams(
            dimension_semantics=("parallel",),
            vmem_limit_bytes=_VMEM_LIMIT),
    )(qh, kh, vh, mh)


def add_layer_norm(x2d, y2d, gamma, beta, *, eps=1e-5, tm=None):
    """LayerNorm(x2d + y2d); x2d/y2d: [M, d]; gamma/beta: [d]."""
    M, d = x2d.shape
    tm = _pick_row_tile(M) if tm is None else tm
    assert M % tm == 0
    kernel = functools.partial(add_ln_kernel, eps=eps)
    return pl.pallas_call(
        kernel,
        out_shape=jax.ShapeDtypeStruct((M, d), x2d.dtype),
        grid_spec=pltpu.PrefetchScalarGridSpec(
            num_scalar_prefetch=0,
            grid=(M // tm,),
            in_specs=[
                pl.BlockSpec((tm, d), lambda i: (i, 0)),
                pl.BlockSpec((tm, d), lambda i: (i, 0)),
                pl.BlockSpec((1, d), lambda i: (0, 0)),
                pl.BlockSpec((1, d), lambda i: (0, 0)),
            ],
            out_specs=pl.BlockSpec((tm, d), lambda i: (i, 0)),
        ),
        compiler_params=pltpu.CompilerParams(
            dimension_semantics=("parallel",),
            vmem_limit_bytes=_VMEM_LIMIT),
    )(x2d, y2d, gamma.reshape(1, d), beta.reshape(1, d))


def position_wise_feed_forward(x2d, w1, b1, w2, b2, *, tm=None, tk=None):
    """x2d: [M, d_model]; w1: [d_model, d_ff]; w2: [d_ff, d_model] -> [M, d_model].
    The d_ff dimension is streamed over the second (reduction) grid axis into an f32
    VMEM accumulator; W1/W2/b1 chunks are pipelined via their index_maps."""
    M, d_model = x2d.shape
    d_ff = w1.shape[1]
    tm = _pick_row_tile(M) if tm is None else tm
    tk = _pick_ff_tile(d_ff) if tk is None else tk
    assert M % tm == 0 and d_ff % tk == 0

    flops = 4 * M * d_model * d_ff  # two matmuls, 2 flops/MAC
    bytes_accessed = int(x2d.size * x2d.dtype.itemsize
                         + w1.size * w1.dtype.itemsize
                         + w2.size * w2.dtype.itemsize
                         + b1.size * b1.dtype.itemsize
                         + b2.size * b2.dtype.itemsize
                         + M * d_model * x2d.dtype.itemsize)

    return pl.pallas_call(
        ffn_kernel,
        out_shape=jax.ShapeDtypeStruct((M, d_model), x2d.dtype),
        grid_spec=pltpu.PrefetchScalarGridSpec(
            num_scalar_prefetch=0,
            grid=(M // tm, d_ff // tk),
            in_specs=[
                pl.BlockSpec((tm, d_model), lambda i, k: (i, 0)),   # x row tile
                pl.BlockSpec((d_model, tk), lambda i, k: (0, k)),   # W1 chunk (streamed)
                pl.BlockSpec((1, tk), lambda i, k: (0, k)),         # b1 chunk
                pl.BlockSpec((tk, d_model), lambda i, k: (k, 0)),   # W2 chunk (streamed)
                pl.BlockSpec((1, d_model), lambda i, k: (0, 0)),    # b2 (resident)
            ],
            out_specs=pl.BlockSpec((tm, d_model), lambda i, k: (i, 0)),
            scratch_shapes=[pltpu.VMEM((tm, d_model), jnp.float32)],
        ),
        compiler_params=pltpu.CompilerParams(
            dimension_semantics=("parallel", "arbitrary"),
            vmem_limit_bytes=_VMEM_LIMIT),
        cost_estimate=pl.CostEstimate(flops=flops, transcendentals=0,
                                      bytes_accessed=bytes_accessed),
    )(x2d, w1, b1.reshape(1, d_ff), w2, b2.reshape(1, d_model))


# ----------------------------------------------------------------------------
# DecoderLayer forward (Pallas path)
# ----------------------------------------------------------------------------

def multi_head_attention(x_q, x_kv, p, mask, num_heads):
    B, S_q, d_model = x_q.shape
    S_k = x_kv.shape[1]
    d_k = d_model // num_heads
    M_q, M_k = B * S_q, B * S_k

    q = linear(x_q.reshape(M_q, d_model), p["wq"], p["bq"])
    k = linear(x_kv.reshape(M_k, d_model), p["wk"], p["bk"])
    v = linear(x_kv.reshape(M_k, d_model), p["wv"], p["bv"])

    def split_heads(t, S):
        return (t.reshape(B, S, num_heads, d_k)
                 .transpose(0, 2, 1, 3)
                 .reshape(B * num_heads, S, d_k))

    qh, kh, vh = split_heads(q, S_q), split_heads(k, S_k), split_heads(v, S_k)

    if mask is None:
        mh = jnp.ones((B * num_heads, S_q, S_k), jnp.float32)
    else:
        mh = jnp.broadcast_to(mask.astype(jnp.float32),
                              (B, num_heads, S_q, S_k)).reshape(B * num_heads, S_q, S_k)

    oh = fused_attention(qh, kh, vh, mh, sm_scale=1.0 / math.sqrt(d_k))

    o = (oh.reshape(B, num_heads, S_q, d_k)
           .transpose(0, 2, 1, 3)
           .reshape(M_q, d_model))
    return linear(o, p["wo"], p["bo"]).reshape(B, S_q, d_model)


def decoder_layer_forward(x, enc_output, src_mask, tgt_mask, params, num_heads):
    # TODO(synk): dropout is a no-op here (inference/eval mode); training-mode masks not implemented.
    B, S, d_model = x.shape
    M = B * S

    attn = multi_head_attention(x, x, params["self_attn"], tgt_mask, num_heads)
    g1, bn1 = params["norm1"]
    x = add_layer_norm(x.reshape(M, d_model), attn.reshape(M, d_model), g1, bn1).reshape(B, S, d_model)

    attn = multi_head_attention(x, enc_output, params["cross_attn"], src_mask, num_heads)
    g2, bn2 = params["norm2"]
    x = add_layer_norm(x.reshape(M, d_model), attn.reshape(M, d_model), g2, bn2).reshape(B, S, d_model)

    fp = params["ffn"]
    ff = position_wise_feed_forward(x.reshape(M, d_model), fp["w1"], fp["b1"], fp["w2"], fp["b2"])
    g3, bn3 = params["norm3"]
    x = add_layer_norm(x.reshape(M, d_model), ff, g3, bn3).reshape(B, S, d_model)
    return x


# ----------------------------------------------------------------------------
# Parameter init (matches nn.Linear U(-1/sqrt(fan_in), 1/sqrt(fan_in)); LN: gamma=1, beta=0)
# ----------------------------------------------------------------------------

def _init_linear(key, d_in, d_out, weight_dtype):
    kw, kb = jax.random.split(key)
    bound = 1.0 / math.sqrt(d_in)
    w = jax.random.uniform(kw, (d_in, d_out), jnp.float32, -bound, bound).astype(weight_dtype)
    b = jax.random.uniform(kb, (d_out,), jnp.float32, -bound, bound)
    return w, b


def init_decoder_layer_params(key, d_model, num_heads, d_ff, weight_dtype=jnp.bfloat16):
    keys = jax.random.split(key, 12)

    def attn_params(ks):
        wq, bq = _init_linear(ks[0], d_model, d_model, weight_dtype)
        wk, bk = _init_linear(ks[1], d_model, d_model, weight_dtype)
        wv, bv = _init_linear(ks[2], d_model, d_model, weight_dtype)
        wo, bo = _init_linear(ks[3], d_model, d_model, weight_dtype)
        return dict(wq=wq, bq=bq, wk=wk, bk=bk, wv=wv, bv=bv, wo=wo, bo=bo)

    w1, b1 = _init_linear(keys[8], d_model, d_ff, weight_dtype)
    w2, b2 = _init_linear(keys[9], d_ff, d_model, weight_dtype)

    ln = lambda: (jnp.ones((d_model,), jnp.float32), jnp.zeros((d_model,), jnp.float32))
    return {
        "self_attn": attn_params(keys[0:4]),
        "cross_attn": attn_params(keys[4:8]),
        "ffn": dict(w1=w1, b1=b1, w2=w2, b2=b2),
        "norm1": ln(),
        "norm2": ln(),
        "norm3": ln(),
    }


# ----------------------------------------------------------------------------
# Pure-JAX f32 reference (same math as the PyTorch DecoderLayer in eval mode)
# ----------------------------------------------------------------------------

def ref_decoder_layer(x, enc_output, src_mask, tgt_mask, params, num_heads, eps=1e-5):
    def lin(t, w, b):
        return t @ w.astype(jnp.float32) + b

    def mha(xq, xkv, p, mask):
        B, Sq, dm = xq.shape
        Sk = xkv.shape[1]
        dk = dm // num_heads

        def split(t, S):
            return t.reshape(B, S, num_heads, dk).transpose(0, 2, 1, 3)

        Q = split(lin(xq, p["wq"], p["bq"]), Sq)
        K = split(lin(xkv, p["wk"], p["bk"]), Sk)
        V = split(lin(xkv, p["wv"], p["bv"]), Sk)
        s = jnp.einsum("bhqd,bhkd->bhqk", Q, K) / math.sqrt(dk)
        if mask is not None:
            s = jnp.where(mask == 0, -1e9, s)
        a = jax.nn.softmax(s, axis=-1)
        o = jnp.einsum("bhqk,bhkd->bhqd", a, V)
        o = o.transpose(0, 2, 1, 3).reshape(B, Sq, dm)
        return lin(o, p["wo"], p["bo"])

    def ln(t, g, b_):
        mu = jnp.mean(t, axis=-1, keepdims=True)
        var = jnp.mean((t - mu) ** 2, axis=-1, keepdims=True)
        return (t - mu) / jnp.sqrt(var + eps) * g + b_

    a1 = mha(x, x, params["self_attn"], tgt_mask)
    x1 = ln(x + a1, *params["norm1"])
    a2 = mha(x1, enc_output, params["cross_attn"], src_mask)
    x2 = ln(x1 + a2, *params["norm2"])
    fp = params["ffn"]
    f = jnp.maximum(x2 @ fp["w1"].astype(jnp.float32) + fp["b1"], 0.0) \
        @ fp["w2"].astype(jnp.float32) + fp["b2"]
    return ln(x2 + f, *params["norm3"])


# ----------------------------------------------------------------------------
# Demo
# ----------------------------------------------------------------------------

if __name__ == "__main__":
    batch, seq_tgt, seq_src = 2, 8, 8
    d_model, num_heads, d_ff = 512, 8, 2048   # module constants

    key = jax.random.PRNGKey(0)
    kx, ke, kp = jax.random.split(key, 3)
    x = jax.random.normal(kx, (batch, seq_tgt, d_model), jnp.float32)
    enc_output = jax.random.normal(ke, (batch, seq_src, d_model), jnp.float32)
    params = init_decoder_layer_params(kp, d_model, num_heads, d_ff)

    # Causal target mask (1 = attend, 0 = masked); no source mask.
    tgt_mask = jnp.tril(jnp.ones((seq_tgt, seq_tgt), jnp.float32))[None, None]
    src_mask = None

    out = decoder_layer_forward(x, enc_output, src_mask, tgt_mask, params, num_heads)
    out = jax.block_until_ready(out)

    ref = ref_decoder_layer(x, enc_output, src_mask, tgt_mask, params, num_heads)
    assert out.shape == (batch, seq_tgt, d_model)
    max_err = float(jnp.max(jnp.abs(out - ref)))
    # bf16 MXU inputs with f32 accumulation vs f32 reference -> loosened tolerance.
    assert jnp.allclose(out, ref, atol=5e-2, rtol=5e-2), f"mismatch vs reference (max|err|={max_err})"

    print("KERNEL_OK")
</pallas_src>

<mosaic_0001>
module attributes {stable_mosaic.version = 11 : i64} {
  func.func @linear_kernel(%arg0: i32, %arg1: memref<8x512xf32, #tpu.memory_space<vmem>>, %arg2: memref<512x512xbf16, #tpu.memory_space<vmem>>, %arg3: memref<1x512xf32, #tpu.memory_space<vmem>>, %arg4: memref<8x512xf32, #tpu.memory_space<vmem>>) attributes {dimension_semantics = [#tpu.dimension_semantics<parallel>], iteration_bounds = array<i64: 2>, scalar_prefetch = 0 : i64, scratch_operands = 0 : i64, tpu.core_type = #tpu.core_type<tc>, window_params = [{transform_indices = @transform_0, window_bounds = array<i64: 8, 512>}, {pipeline_mode = #tpu.pipeline_mode<synchronous>, transform_indices = @transform_1, window_bounds = array<i64: 512, 512>}, {pipeline_mode = #tpu.pipeline_mode<synchronous>, transform_indices = @transform_2, window_bounds = array<i64: 1, 512>}, {transform_indices = @transform_3, window_bounds = array<i64: 8, 512>}]} {
    %c0 = arith.constant 0 : index
    %c0_0 = arith.constant 0 : index
    %0 = vector.load %arg1[%c0, %c0_0] : memref<8x512xf32, #tpu.memory_space<vmem>>, vector<8x512xf32>
    %1 = arith.truncf %0 : vector<8x512xf32> to vector<8x512xbf16>
    %c0_1 = arith.constant 0 : index
    %c0_2 = arith.constant 0 : index
    %2 = vector.load %arg2[%c0_1, %c0_2] : memref<512x512xbf16, #tpu.memory_space<vmem>>, vector<512x512xbf16>
    %cst = arith.constant dense<0.000000e+00> : vector<8x512xf32>
    %3 = tpu.matmul %1, %2, %cst {dimension_numbers = #tpu.dot_dimension_numbers<[1], [0], [0], [1], [0, 0, 1, 1], [], []>} : vector<8x512xbf16>, vector<512x512xbf16>, vector<8x512xf32> -> vector<8x512xf32>
    %c0_3 = arith.constant 0 : index
    %c0_4 = arith.constant 0 : index
    %4 = vector.load %arg3[%c0_3, %c0_4] : memref<1x512xf32, #tpu.memory_space<vmem>>, vector<1x512xf32>
    %5 = vector.broadcast %4 : vector<1x512xf32> to vector<8x512xf32>
    %6 = arith.addf %3, %5 : vector<8x512xf32>
    %c0_5 = arith.constant 0 : index
    %c0_6 = arith.constant 0 : index
    %7 = vector.load %arg4[%c0_5, %c0_6] : memref<8x512xf32, #tpu.memory_space<vmem>>, vector<8x512xf32>
    tpu.vector_store %arg4[%c0_5, %c0_6], %6 {strides = array<i32>} : memref<8x512xf32, #tpu.memory_space<vmem>>, vector<8x512xf32>,
    return
  }
  func.func @transform_0(%arg0: i32) -> (i32, i32) {
    %c0_i32 = arith.constant 0 : i32
    %c0_i32_0 = arith.constant 0 : i32
    return %arg0, %c0_i32 : i32, i32
  }
  func.func @transform_1(%arg0: i32) -> (i32, i32) {
    %c0_i32 = arith.constant 0 : i32
    %c0_i32_0 = arith.constant 0 : i32
    %c0_i32_1 = arith.constant 0 : i32
    return %c0_i32, %c0_i32_0 : i32, i32
  }
  func.func @transform_2(%arg0: i32) -> (i32, i32) {
    %c0_i32 = arith.constant 0 : i32
    %c0_i32_0 = arith.constant 0 : i32
    %c0_i32_1 = arith.constant 0 : i32
    return %c0_i32, %c0_i32_0 : i32, i32
  }
  func.func @transform_3(%arg0: i32) -> (i32, i32) {
    %c0_i32 = arith.constant 0 : i32
    %c0_i32_0 = arith.constant 0 : i32
    return %arg0, %c0_i32 : i32, i32
  }
}

</mosaic_0001>

<llo_original>
// kernel: tpu_custom_call.1
$region0: #{tpu_custom_call.1}
  #allocation0 [shape = 'u32[]', space=smem, size = 0x4, offset = 0x4, fixed_abs, tag = 'smem constant byte address 0x4 - core index']
  #allocation1 [shape = 'u32[72,128]{1,0:T(1,128)}', space=vmem, size = 0x9000, scoped, tag = 'internal scratch']
  %s0 = inlined_call_operand.hbm [shape: f32[16,512], index: 0, kind: input, shape index: {}]
  %s1 = inlined_call_operand.hbm [shape: bf16[512,512], index: 1, kind: input, shape index: {}]
  %s2 = inlined_call_operand.hbm [shape: f32[1,512], index: 2, kind: input, shape index: {}]
  %s3 = inlined_call_operand.hbm [shape: f32[16,512], index: 3, kind: output, shape index: {}]
  %s4 = sld [smem:[#allocation0]]
  $region57: #{tpu_custom_call.1} parent=0
    _
  %s6 = ssub.s32 1, %s4
  %s7 = scalar_select 0, %s6, %s4
  $region1: #{tpu_custom_call.1} parent=0
    #allocation2 [shape = 'u8[32768]{0}', space=vmem, size = 0x8000, scoped, tag = 'input window, operand 0']
    #allocation3 [shape = 's32[2]{0}', space=sflag, size = 0x8, scoped, tag = 'scoped memory for tpu_custom_call.1']
    #allocation4 [shape = 's32[2]{0}', space=sflag, size = 0x8, scoped, tag = 'scoped memory for tpu_custom_call.1']
    #allocation5 [shape = 'u8[524288]{0}', space=vmem, size = 0x80000, scoped, tag = 'input window, operand 1, single buffered']
    #allocation6 [shape = 's32[1]{0}', space=sflag, size = 0x4, scoped, tag = 'scoped memory for tpu_custom_call.1']
    #allocation7 [shape = 'u8[2048]{0}', space=vmem, size = 0x800, scoped, tag = 'input window, operand 2, single buffered']
    #allocation8 [shape = 'u8[32768]{0}', space=vmem, size = 0x8000, scoped, tag = 'output window, operand 0']
    %8 = vsyncpa [#allocation3], 0
    %s9 = scalar_lea.sflag [#allocation3], 1
    %10 = vsyncpa %s9, 0
    %11 = vsyncpa [#allocation6], 0
    %12 = vsyncpa [#allocation4], 0
    %s13 = scalar_lea.sflag [#allocation4], 1
    %14 = vsyncpa %s13, 0
    loop: start=0, step=1, limit=4
    $region2: #{tpu_custom_call.1} parent=1 // loop_pre_header
      _
    $region3: #{tpu_custom_call.1} parent=1 // loop_header
      %s16 = sphi 0, %s20
      %p17 = scmp.ge.s32.totalorder %s16, 4
      %s26 = sphi 0, %s28
      %s29 = sphi 0, %s26
      %s30 = sphi 0, %s29
      %s46 = sphi 0, %s30
      %s50 = sphi 0, %s50
      %s52 = sphi 0, %s50
      %s53 = sphi 0, %s52
      %s67 = sphi 0, %s53
      %s71 = sphi 0, %s71
      %s73 = sphi 0, %s71
      %s74 = sphi 0, %s73
      %s88 = sphi 0, %s74
      %s94 = sphi 0, %s96
      %s97 = sphi 0, %s94
      %s98 = sphi 0, %s97
      %s114 = sphi 0, %s98
    $region4: #{tpu_custom_call.1} parent=1 // loop_header_branch
      %19 = sbr.rel (%p17) target = $region8
    $region5: #{tpu_custom_call.1} parent=1 // loop_body
      %s21 = ssub.s32 %s16, 1
      %s22 = ssub.s32 %s16, 2
      %s23 = sadd.s32 %s16, 1
      %s24 = ssub.s32 %s16, %s23
      %p25 = scmp.eq.s32.totalorder %s24, 0
      %s27 = sadd.s32 %s26, 1
      %s28 = scalar_select %p25, %s26, %s27
      %p31 = pneg %p25
      %p32 = scmp.eq.s32.totalorder %s16, 1
      %p33 = por %p31, %p32
      %p34 = scmp.ne.s32.totalorder %s26, %s29
      %p35 = scmp.eq.s32.totalorder %s16, 0
      %p36 = por %p34, %p35
      %p37 = scmp.ne.s32.totalorder %s26, %s29
      %p38 = scmp.eq.s32.totalorder %s21, 1
      %p39 = por %p37, %p38
      %p40 = scmp.ne.s32.totalorder %s29, %s30
      %p41 = scmp.eq.s32.totalorder %s21, 0
      %p42 = por %p40, %p41
      %p43 = scmp.ne.s32.totalorder %s29, %s30
      %p44 = scmp.eq.s32.totalorder %s22, 1
      %p45 = por %p43, %p44
      %p47 = scmp.ne.s32.totalorder %s30, %s46
      %p48 = scmp.eq.s32.totalorder %s22, 0
      %p49 = por %p47, %p48
      %s51 = sadd.s32 %s50, 1
      %p54 = scmp.eq.s32.totalorder %s16, 1
      %p55 = scmp.ne.s32.totalorder %s50, %s52
      %p56 = scmp.eq.s32.totalorder %s16, 0
      %p57 = por %p55, %p56
      %p58 = scmp.ne.s32.totalorder %s50, %s52
      %p59 = scmp.eq.s32.totalorder %s21, 1
      %p60 = por %p58, %p59
      %p61 = scmp.ne.s32.totalorder %s52, %s53
      %p62 = scmp.eq.s32.totalorder %s21, 0
      %p63 = por %p61, %p62
      %p64 = scmp.ne.s32.totalorder %s52, %s53
      %p65 = scmp.eq.s32.totalorder %s22, 1
      %p66 = por %p64, %p65
      %p68 = scmp.ne.s32.totalorder %s53, %s67
      %p69 = scmp.eq.s32.totalorder %s22, 0
      %p70 = por %p68, %p69
      %s72 = sadd.s32 %s71, 1
      %p75 = scmp.eq.s32.totalorder %s16, 1
      %p76 = scmp.ne.s32.totalorder %s71, %s73
      %p77 = scmp.eq.s32.totalorder %s16, 0
      %p78 = por %p76, %p77
      %p79 = scmp.ne.s32.totalorder %s71, %s73
      %p80 = scmp.eq.s32.totalorder %s21, 1
      %p81 = por %p79, %p80
      %p82 = scmp.ne.s32.totalorder %s73, %s74
      %p83 = scmp.eq.s32.totalorder %s21, 0
      %p84 = por %p82, %p83
      %p85 = scmp.ne.s32.totalorder %s73, %s74
      %p86 = scmp.eq.s32.totalorder %s22, 1
      %p87 = por %p85, %p86
      %p89 = scmp.ne.s32.totalorder %s74, %s88
      %p90 = scmp.eq.s32.totalorder %s22, 0
      %p91 = por %p89, %p90
      %s92 = ssub.s32 %s16, %s23
      %p93 = scmp.eq.s32.totalorder %s92, 0
      %s95 = sadd.s32 %s94, 1
      %s96 = scalar_select %p93, %s94, %s95
      %p99 = pneg %p93
      %p100 = scmp.eq.s32.totalorder %s16, 1
      %p101 = por %p99, %p100
      %p102 = scmp.ne.s32.totalorder %s94, %s97
      %p103 = scmp.eq.s32.totalorder %s16, 0
      %p104 = por %p102, %p103
      %p105 = scmp.ne.s32.totalorder %s94, %s97
      %p106 = scmp.eq.s32.totalorder %s21, 1
      %p107 = por %p105, %p106
      %p108 = scmp.ne.s32.totalorder %s97, %s98
      %p109 = scmp.eq.s32.totalorder %s21, 0
      %p110 = por %p108, %p109
      %p111 = scmp.ne.s32.totalorder %s97, %s98
      %p112 = scmp.eq.s32.totalorder %s22, 1
      %p113 = por %p111, %p112
      %p115 = scmp.ne.s32.totalorder %s98, %s114
      %p116 = scmp.eq.s32.totalorder %s22, 0
      %p117 = por %p115, %p116
      %p118 = scmp.le.s32.totalorder 1, %s16
      %p119 = scmp.lt.s32.totalorder %s16, 3
      %p120 = pnand %p118, %p119
      %p121 = pneg %p120
      // Predicated region
      $region9: #{tpu_custom_call.1} parent=5 // pred_check
        _
      $region10: #{tpu_custom_call.1} parent=5 // pred_check_branch
        %123 = sbr.rel (%p120) target = $region12
      $region11: #{tpu_custom_call.1} parent=5 // pred_region
        %s124 = ssub.s32 %s16, 1
        // Predicated region
        $region13: #{tpu_custom_call.1} parent=11 // pred_check
          %p125 = pneg %p63
        $region14: #{tpu_custom_call.1} parent=11 // pred_check_branch
          %127 = sbr.rel (%p125) target = $region16
        $region15: #{tpu_custom_call.1} parent=11 // pred_region
          %129 = vsyncadd [#allocation6], 0
          %s130 = sshll.u32 %s1, 4
          %s131 = int_to_ptr.hbm [resolvable:$true] %s130
          %s132 = sshll.u32 [#allocation5], 4
          %s133 = int_to_ptr.vmem [resolvable:$true] %s132
          %138 = dma.hbm_to_vmem [thread:$0]  %s131, 16384, %s133, [#allocation6], 256, 256, 16
        $region16: #{tpu_custom_call.1} parent=11 // pred_fallthru
          _
        // Predicated region
        $region17: #{tpu_custom_call.1} parent=11 // pred_check
          %p139 = pneg %p84
        $region18: #{tpu_custom_call.1} parent=11 // pred_check_branch
          %141 = sbr.rel (%p139) target = $region20
        $region19: #{tpu_custom_call.1} parent=11 // pred_region
          %143 = vsyncadd [#allocation6], 0
          %s145 = sshll.u32 %s2, 4
          %s146 = int_to_ptr.hbm [resolvable:$true] %s145
          %s147 = sshll.u32 [#allocation7], 4
          %s148 = int_to_ptr.vmem [resolvable:$true] %s147
          %150 = dma.hbm_to_vmem [thread:$0]  %s146, 64, %s148, [#allocation6]
        $region20: #{tpu_custom_call.1} parent=11 // pred_fallthru
          _
      $region12: #{tpu_custom_call.1} parent=5 // pred_fallthru
        _
      %p151 = scmp.lt.s32.totalorder %s16, 2
      // Predicated region
      $region21: #{tpu_custom_call.1} parent=5 // pred_check
        %p152 = pneg %p151
      $region22: #{tpu_custom_call.1} parent=5 // pred_check_branch
        %154 = sbr.rel (%p152) target = $region24
      $region23: #{tpu_custom_call.1} parent=5 // pred_region
        // Predicated region
        $region25: #{tpu_custom_call.1} parent=23 // pred_check
          %p155 = pneg %p36
        $region26: #{tpu_custom_call.1} parent=23 // pred_check_branch
          %157 = sbr.rel (%p155) target = $region28
        $region27: #{tpu_custom_call.1} parent=23 // pred_region
          %s158 = sand.u32 %s26, 1
          %s159 = scalar_lea.sflag [#allocation3], %s158
          %s160 = sand.u32 %s26, 1
          %s161 = smul.addr %s160, 32
          %s162 = scalar_lea.vmem [#allocation2], %s161
          %164 = vsyncadd %s159, 0
          %s165 = smul.addr %s16, 4
          %s166 = smul.addr %s165, 8
          %s167 = scalar_lea.hbm %s0, %s166
          %s169 = sshll.u32 %s167, 4
          %s170 = int_to_ptr.hbm [resolvable:$true] %s169
          %s171 = sshll.u32 %s162, 4
          %s172 = int_to_ptr.vmem [resolvable:$true] %s171
          %174 = dma.hbm_to_vmem [thread:$0]  %s170, 512, %s172, %s159
        $region28: #{tpu_custom_call.1} parent=23 // pred_fallthru
          _
      $region24: #{tpu_custom_call.1} parent=5 // pred_fallthru
        _
      %p175 = scmp.le.s32.totalorder 1, %s16
      %p176 = scmp.lt.s32.totalorder %s16, 3
      %p177 = pnand %p175, %p176
      %p178 = pneg %p177
      // Predicated region
      $region29: #{tpu_custom_call.1} parent=5 // pred_check
        _
      $region30: #{tpu_custom_call.1} parent=5 // pred_check_branch
        %180 = sbr.rel (%p177) target = $region32
      $region31: #{tpu_custom_call.1} parent=5 // pred_region
        %s181 = ssub.s32 %s16, 1
        %s182 = sand.u32 %s29, 1
        %s183 = scalar_lea.sflag [#allocation3], %s182
        %s184 = sand.u32 %s29, 1
        %s185 = smul.addr %s184, 32
        %s186 = scalar_lea.vmem [#allocation2], %s185
        // Predicated region
        $region33: #{tpu_custom_call.1} parent=31 // pred_check
          %p187 = pneg %p42
        $region34: #{tpu_custom_call.1} parent=31 // pred_check_branch
          %189 = sbr.rel (%p187) target = $region36
        $region35: #{tpu_custom_call.1} parent=31 // pred_region
          %191 = dma.done %s183, 512
        $region36: #{tpu_custom_call.1} parent=31 // pred_fallthru
          _
        // Predicated region
        $region37: #{tpu_custom_call.1} parent=31 // pred_check
          %p192 = pneg %p63
        $region38: #{tpu_custom_call.1} parent=31 // pred_check_branch
          %194 = sbr.rel (%p192) target = $region40
        $region39: #{tpu_custom_call.1} parent=31 // pred_region
          %196 = dma.done [#allocation6], 16384
        $region40: #{tpu_custom_call.1} parent=31 // pred_fallthru
          _
        // Predicated region
        $region41: #{tpu_custom_call.1} parent=31 // pred_check
          %p197 = pneg %p84
        $region42: #{tpu_custom_call.1} parent=31 // pred_check_branch
          %199 = sbr.rel (%p197) target = $region44
        $region43: #{tpu_custom_call.1} parent=31 // pred_region
          %201 = dma.done [#allocation6], 64
        $region44: #{tpu_custom_call.1} parent=31 // pred_fallthru
          _
        %s202 = sand.u32 %s29, 1
        %s203 = scalar_lea.sflag [#allocation3], %s202
        %s204 = sand.u32 %s29, 1
        %s205 = smul.addr %s204, 32
        %s206 = scalar_lea.vmem [#allocation2], %s205
        %p207 = pneg %p42
        %p208 = pneg %p39
        %p209 = pneg %p63
        %p210 = pneg %p60
        %p211 = pneg %p84
        %p212 = pneg %p81
        %p213 = pneg %p110
        %p214 = pneg %p107
        %s215 = sand.u32 %s97, 1
        %s216 = scalar_lea.sflag [#allocation4], %s215
        %s217 = sand.u32 %s97, 1
        %s218 = smul.addr %s217, 32
        %s219 = scalar_lea.vmem [#allocation8], %s218
        %v220 = vld [vmem:[%s186] sm:$0xff]
        %v221 = vld [vmem:[%s186 + $0x8] sm:$0xff]
        %v222 = vld [vmem:[%s186 + $0x10] sm:$0xff]
        %v223 = vld [vmem:[%s186 + $0x18] sm:$0xff]
        %v224 = vpack.c.bf16 %v220, %v220
        %v225 = vpack.c.bf16 %v221, %v221
        %v226 = vpack.c.bf16 %v222, %v222
        %v227 = vpack.c.bf16 %v223, %v223
        %v228 = vld [vmem:[#allocation5] sm:$0xff]
        %v229 = vld [vmem:[#allocation5 + $0x8] sm:$0xff]
        %v230 = vld [vmem:[#allocation5 + $0x10] sm:$0xff]
        %v231 = vld [vmem:[#allocation5 + $0x18] sm:$0xff]
        %v232 = vld [vmem:[#allocation5 + $0x20] sm:$0xff]
        %v233 = vld [vmem:[#allocation5 + $0x28] sm:$0xff]
        %v234 = vld [vmem:[#allocation5 + $0x30] sm:$0xff]
        %v235 = vld [vmem:[#allocation5 + $0x38] sm:$0xff]
        %v236 = vld [vmem:[#allocation5 + $0x40] sm:$0xff]
        %v237 = vld [vmem:[#allocation5 + $0x48] sm:$0xff]
        %v238 = vld [vmem:[#allocation5 + $0x50] sm:$0xff]
        %v239 = vld [vmem:[#allocation5 + $0x58] sm:$0xff]
        %v240 = vld [vmem:[#allocation5 + $0x60] sm:$0xff]
        %v241 = vld [vmem:[#allocation5 + $0x68] sm:$0xff]
        %v242 = vld [vmem:[#allocation5 + $0x70] sm:$0xff]
        %v243 = vld [vmem:[#allocation5 + $0x78] sm:$0xff]
        %v244 = vld [vmem:[#allocation5 + $0x80] sm:$0xff]
        %v245 = vld [vmem:[#allocation5 + $0x88] sm:$0xff]
        %v246 = vld [vmem:[#allocation5 + $0x90] sm:$0xff]
        %v247 = vld [vmem:[#allocation5 + $0x98] sm:$0xff]
        %v248 = vld [vmem:[#allocation5 + $0xa0] sm:$0xff]
        %v249 = vld [vmem:[#allocation5 + $0xa8] sm:$0xff]
        %v250 = vld [vmem:[#allocation5 + $0xb0] sm:$0xff]
        %v251 = vld [vmem:[#allocation5 + $0xb8] sm:$0xff]
        %v252 = vld [vmem:[#allocation5 + $0xc0] sm:$0xff]
        %v253 = vld [vmem:[#allocation5 + $0xc8] sm:$0xff]
        %v254 = vld [vmem:[#allocation5 + $0xd0] sm:$0xff]
        %v255 = vld [vmem:[#allocation5 + $0xd8] sm:$0xff]
        %v256 = vld [vmem:[#allocation5 + $0xe0] sm:$0xff]
        %v257 = vld [vmem:[#allocation5 + $0xe8] sm:$0xff]
        %v258 = vld [vmem:[#allocation5 + $0xf0] sm:$0xff]
        %v259 = vld [vmem:[#allocation5 + $0xf8] sm:$0xff]
        %v260 = vld [vmem:[#allocation5 + $0x100] sm:$0xff]
        %v261 = vld [vmem:[#allocation5 + $0x108] sm:$0xff]
        %v262 = vld [vmem:[#allocation5 + $0x110] sm:$0xff]
        %v263 = vld [vmem:[#allocation5 + $0x118] sm:$0xff]
        %v264 = vld [vmem:[#allocation5 + $0x120] sm:$0xff]
        %v265 = vld [vmem:[#allocation5 + $0x128] sm:$0xff]
        %v266 = vld [vmem:[#allocation5 + $0x130] sm:$0xff]
        %v267 = vld [vmem:[#allocation5 + $0x138] sm:$0xff]
        %v268 = vld [vmem:[#allocation5 + $0x140] sm:$0xff]
        %v269 = vld [vmem:[#allocation5 + $0x148] sm:$0xff]
        %v270 = vld [vmem:[#allocation5 + $0x150] sm:$0xff]
        %v271 = vld [vmem:[#allocation5 + $0x158] sm:$0xff]
        %v272 = vld [vmem:[#allocation5 + $0x160] sm:$0xff]
        %v273 = vld [vmem:[#allocation5 + $0x168] sm:$0xff]
        %v274 = vld [vmem:[#allocation5 + $0x170] sm:$0xff]
        %v275 = vld [vmem:[#allocation5 + $0x178] sm:$0xff]
        %v276 = vld [vmem:[#allocation5 + $0x180] sm:$0xff]
        %v277 = vld [vmem:[#allocation5 + $0x188] sm:$0xff]
        %v278 = vld [vmem:[#allocation5 + $0x190] sm:$0xff]
        %v279 = vld [vmem:[#allocation5 + $0x198] sm:$0xff]
        %v280 = vld [vmem:[#allocation5 + $0x1a0] sm:$0xff]
        %v281 = vld [vmem:[#allocation5 + $0x1a8] sm:$0xff]
        %v282 = vld [vmem:[#allocation5 + $0x1b0] sm:$0xff]
        %v283 = vld [vmem:[#allocation5 + $0x1b8] sm:$0xff]
        %v284 = vld [vmem:[#allocation5 + $0x1c0] sm:$0xff]
        %v285 = vld [vmem:[#allocation5 + $0x1c8] sm:$0xff]
        %v286 = vld [vmem:[#allocation5 + $0x1d0] sm:$0xff]
        %v287 = vld [vmem:[#allocation5 + $0x1d8] sm:$0xff]
        %v288 = vld [vmem:[#allocation5 + $0x1e0] sm:$0xff]
        %v289 = vld [vmem:[#allocation5 + $0x1e8] sm:$0xff]
        %v290 = vld [vmem:[#allocation5 + $0x1f0] sm:$0xff]
        %v291 = vld [vmem:[#allocation5 + $0x1f8] sm:$0xff]
        %v292 = vld [vmem:[#allocation5 + $0x200] sm:$0xff]
        %v293 = vld [vmem:[#allocation5 + $0x208] sm:$0xff]
        %v294 = vld [vmem:[#allocation5 + $0x210] sm:$0xff]
        %v295 = vld [vmem:[#allocation5 + $0x218] sm:$0xff]
        %v296 = vld [vmem:[#allocation5 + $0x220] sm:$0xff]
        %v297 = vld [vmem:[#allocation5 + $0x228] sm:$0xff]
        %v298 = vld [vmem:[#allocation5 + $0x230] sm:$0xff]
        %v299 = vld [vmem:[#allocation5 + $0x238] sm:$0xff]
        %v300 = vld [vmem:[#allocation5 + $0x240] sm:$0xff]
        %v301 = vld [vmem:[#allocation5 + $0x248] sm:$0xff]
        %v302 = vld [vmem:[#allocation5 + $0x250] sm:$0xff]
        %v303 = vld [vmem:[#allocation5 + $0x258] sm:$0xff]
        %v304 = vld [vmem:[#allocation5 + $0x260] sm:$0xff]
        %v305 = vld [vmem:[#allocation5 + $0x268] sm:$0xff]
        %v306 = vld [vmem:[#allocation5 + $0x270] sm:$0xff]
        %v307 = vld [vmem:[#allocation5 + $0x278] sm:$0xff]
        %v308 = vld [vmem:[#allocation5 + $0x280] sm:$0xff]
        %v309 = vld [vmem:[#allocation5 + $0x288] sm:$0xff]
        %v310 = vld [vmem:[#allocation5 + $0x290] sm:$0xff]
        %v311 = vld [vmem:[#allocation5 + $0x298] sm:$0xff]
        %v312 = vld [vmem:[#allocation5 + $0x2a0] sm:$0xff]
        %v313 = vld [vmem:[#allocation5 + $0x2a8] sm:$0xff]
        %v314 = vld [vmem:[#allocation5 + $0x2b0] sm:$0xff]
        %v315 = vld [vmem:[#allocation5 + $0x2b8] sm:$0xff]
        %v316 = vld [vmem:[#allocation5 + $0x2c0] sm:$0xff]
        %v317 = vld [vmem:[#allocation5 + $0x2c8] sm:$0xff]
        %v318 = vld [vmem:[#allocation5 + $0x2d0] sm:$0xff]
        %v319 = vld [vmem:[#allocation5 + $0x2d8] sm:$0xff]
        %v320 = vld [vmem:[#allocation5 + $0x2e0] sm:$0xff]
        %v321 = vld [vmem:[#allocation5 + $0x2e8] sm:$0xff]
        %v322 = vld [vmem:[#allocation5 + $0x2f0] sm:$0xff]
        %v323 = vld [vmem:[#allocation5 + $0x2f8] sm:$0xff]
        %v324 = vld [vmem:[#allocation5 + $0x300] sm:$0xff]
        %v325 = vld [vmem:[#allocation5 + $0x308] sm:$0xff]
        %v326 = vld [vmem:[#allocation5 + $0x310] sm:$0xff]
        %v327 = vld [vmem:[#allocation5 + $0x318] sm:$0xff]
        %v328 = vld [vmem:[#allocation5 + $0x320] sm:$0xff]
        %v329 = vld [vmem:[#allocation5 + $0x328] sm:$0xff]
        %v330 = vld [vmem:[#allocation5 + $0x330] sm:$0xff]
        %v331 = vld [vmem:[#allocation5 + $0x338] sm:$0xff]
        %v332 = vld [vmem:[#allocation5 + $0x340] sm:$0xff]
        %v333 = vld [vmem:[#allocation5 + $0x348] sm:$0xff]
        %v334 = vld [vmem:[#allocation5 + $0x350] sm:$0xff]
        %v335 = vld [vmem:[#allocation5 + $0x358] sm:$0xff]
        %v336 = vld [vmem:[#allocation5 + $0x360] sm:$0xff]
        %v337 = vld [vmem:[#allocation5 + $0x368] sm:$0xff]
        %v338 = vld [vmem:[#allocation5 + $0x370] sm:$0xff]
        %v339 = vld [vmem:[#allocation5 + $0x378] sm:$0xff]
        %v340 = vld [vmem:[#allocation5 + $0x380] sm:$0xff]
        %v341 = vld [vmem:[#allocation5 + $0x388] sm:$0xff]
        %v342 = vld [vmem:[#allocation5 + $0x390] sm:$0xff]
        %v343 = vld [vmem:[#allocation5 + $0x398] sm:$0xff]
        %v344 = vld [vmem:[#allocation5 + $0x3a0] sm:$0xff]
        %v345 = vld [vmem:[#allocation5 + $0x3a8] sm:$0xff]
        %v346 = vld [vmem:[#allocation5 + $0x3b0] sm:$0xff]
        %v347 = vld [vmem:[#allocation5 + $0x3b8] sm:$0xff]
        %v348 = vld [vmem:[#allocation5 + $0x3c0] sm:$0xff]
        %v349 = vld [vmem:[#allocation5 + $0x3c8] sm:$0xff]
        %v350 = vld [vmem:[#allocation5 + $0x3d0] sm:$0xff]
        %v351 = vld [vmem:[#allocation5 + $0x3d8] sm:$0xff]
        %v352 = vld [vmem:[#allocation5 + $0x3e0] sm:$0xff]
        %v353 = vld [vmem:[#allocation5 + $0x3e8] sm:$0xff]
        %v354 = vld [vmem:[#allocation5 + $0x3f0] sm:$0xff]
        %v355 = vld [vmem:[#allocation5 + $0x3f8] sm:$0xff]
        %v356 = vld [vmem:[#allocation7] sm:$0xf]
        %v358 = vperm.slane %v356, 0
        %v359 = vperm.slane %v356, 1
        %v360 = vperm.slane %v356, 2
        %v361 = vperm.slane %v356, 3
        %v494 = vunpack.c.l.b16 %v228
        %v495 = vunpack.c.h.b16 %v228
        %v496 = vunpack.c.l.b16 %v229
        %v497 = vunpack.c.h.b16 %v229
        %v498 = vunpack.c.l.b16 %v230
        %v499 = vunpack.c.h.b16 %v230
        %v500 = vunpack.c.l.b16 %v231
        %v501 = vunpack.c.h.b16 %v231
        %v502 = vunpack.c.l.b16 %v232
        %v503 = vunpack.c.h.b16 %v232
        %v504 = vunpack.c.l.b16 %v233
        %v505 = vunpack.c.h.b16 %v233
        %v506 = vunpack.c.l.b16 %v234
        %v507 = vunpack.c.h.b16 %v234
        %v508 = vunpack.c.l.b16 %v235
        %v509 = vunpack.c.h.b16 %v235
        %v510 = vunpack.c.l.b16 %v236
        %v511 = vunpack.c.h.b16 %v236
        %v512 = vunpack.c.l.b16 %v237
        %v513 = vunpack.c.h.b16 %v237
        %v514 = vunpack.c.l.b16 %v238
        %v515 = vunpack.c.h.b16 %v238
        %v516 = vunpack.c.l.b16 %v239
        %v517 = vunpack.c.h.b16 %v239
        %v518 = vunpack.c.l.b16 %v240
        %v519 = vunpack.c.h.b16 %v240
        %v520 = vunpack.c.l.b16 %v241
        %v521 = vunpack.c.h.b16 %v241
        %v522 = vunpack.c.l.b16 %v242
        %v523 = vunpack.c.h.b16 %v242
        %v524 = vunpack.c.l.b16 %v243
        %v525 = vunpack.c.h.b16 %v243
        %v526 = vunpack.c.l.b16 %v244
        %v527 = vunpack.c.h.b16 %v244
        %v528 = vunpack.c.l.b16 %v245
        %v529 = vunpack.c.h.b16 %v245
        %v530 = vunpack.c.l.b16 %v246
        %v531 = vunpack.c.h.b16 %v246
        %v532 = vunpack.c.l.b16 %v247
        %v533 = vunpack.c.h.b16 %v247
        %v534 = vunpack.c.l.b16 %v248
        %v535 = vunpack.c.h.b16 %v248
        %v536 = vunpack.c.l.b16 %v249
        %v537 = vunpack.c.h.b16 %v249
        %v538 = vunpack.c.l.b16 %v250
        %v539 = vunpack.c.h.b16 %v250
        %v540 = vunpack.c.l.b16 %v251
        %v541 = vunpack.c.h.b16 %v251
        %v542 = vunpack.c.l.b16 %v252
        %v543 = vunpack.c.h.b16 %v252
        %v544 = vunpack.c.l.b16 %v253
        %v545 = vunpack.c.h.b16 %v253
        %v546 = vunpack.c.l.b16 %v254
        %v547 = vunpack.c.h.b16 %v254
        %v548 = vunpack.c.l.b16 %v255
        %v549 = vunpack.c.h.b16 %v255
        %v550 = vunpack.c.l.b16 %v256
        %v551 = vunpack.c.h.b16 %v256
        %v552 = vunpack.c.l.b16 %v257
        %v553 = vunpack.c.h.b16 %v257
        %v554 = vunpack.c.l.b16 %v258
        %v555 = vunpack.c.h.b16 %v258
        %v556 = vunpack.c.l.b16 %v259
        %v557 = vunpack.c.h.b16 %v259
        %v558 = vunpack.c.l.b16 %v260
        %v559 = vunpack.c.h.b16 %v260
        %v560 = vunpack.c.l.b16 %v261
        %v561 = vunpack.c.h.b16 %v261
        %v562 = vunpack.c.l.b16 %v262
        %v563 = vunpack.c.h.b16 %v262
        %v564 = vunpack.c.l.b16 %v263
        %v565 = vunpack.c.h.b16 %v263
        %v566 = vunpack.c.l.b16 %v264
        %v567 = vunpack.c.h.b16 %v264
        %v568 = vunpack.c.l.b16 %v265
        %v569 = vunpack.c.h.b16 %v265
        %v570 = vunpack.c.l.b16 %v266
        %v571 = vunpack.c.h.b16 %v266
        %v572 = vunpack.c.l.b16 %v267
        %v573 = vunpack.c.h.b16 %v267
        %v574 = vunpack.c.l.b16 %v268
        %v575 = vunpack.c.h.b16 %v268
        %v576 = vunpack.c.l.b16 %v269
        %v577 = vunpack.c.h.b16 %v269
        %v578 = vunpack.c.l.b16 %v270
        %v579 = vunpack.c.h.b16 %v270
        %v580 = vunpack.c.l.b16 %v271
        %v581 = vunpack.c.h.b16 %v271
        %v582 = vunpack.c.l.b16 %v272
        %v583 = vunpack.c.h.b16 %v272
        %v584 = vunpack.c.l.b16 %v273
        %v585 = vunpack.c.h.b16 %v273
        %v586 = vunpack.c.l.b16 %v274
        %v587 = vunpack.c.h.b16 %v274
        %v588 = vunpack.c.l.b16 %v275
        %v589 = vunpack.c.h.b16 %v275
        %v590 = vunpack.c.l.b16 %v276
        %v591 = vunpack.c.h.b16 %v276
        %v592 = vunpack.c.l.b16 %v277
        %v593 = vunpack.c.h.b16 %v277
        %v594 = vunpack.c.l.b16 %v278
        %v595 = vunpack.c.h.b16 %v278
        %v596 = vunpack.c.l.b16 %v279
        %v597 = vunpack.c.h.b16 %v279
        %v598 = vunpack.c.l.b16 %v280
        %v599 = vunpack.c.h.b16 %v280
        %v600 = vunpack.c.l.b16 %v281
        %v601 = vunpack.c.h.b16 %v281
        %v602 = vunpack.c.l.b16 %v282
        %v603 = vunpack.c.h.b16 %v282
        %v604 = vunpack.c.l.b16 %v283
        %v605 = vunpack.c.h.b16 %v283
        %v606 = vunpack.c.l.b16 %v284
        %v607 = vunpack.c.h.b16 %v284
        %v608 = vunpack.c.l.b16 %v285
        %v609 = vunpack.c.h.b16 %v285
        %v610 = vunpack.c.l.b16 %v286
        %v611 = vunpack.c.h.b16 %v286
        %v612 = vunpack.c.l.b16 %v287
        %v613 = vunpack.c.h.b16 %v287
        %v614 = vunpack.c.l.b16 %v288
        %v615 = vunpack.c.h.b16 %v288
        %v616 = vunpack.c.l.b16 %v289
        %v617 = vunpack.c.h.b16 %v289
        %v618 = vunpack.c.l.b16 %v290
        %v619 = vunpack.c.h.b16 %v290
        %v620 = vunpack.c.l.b16 %v291
        %v621 = vunpack.c.h.b16 %v291
        %v622 = vunpack.c.l.b16 %v292
        %v623 = vunpack.c.h.b16 %v292
        %v624 = vunpack.c.l.b16 %v293
        %v625 = vunpack.c.h.b16 %v293
        %v626 = vunpack.c.l.b16 %v294
        %v627 = vunpack.c.h.b16 %v294
        %v628 = vunpack.c.l.b16 %v295
        %v629 = vunpack.c.h.b16 %v295
        %v630 = vunpack.c.l.b16 %v296
        %v631 = vunpack.c.h.b16 %v296
        %v632 = vunpack.c.l.b16 %v297
        %v633 = vunpack.c.h.b16 %v297
        %v634 = vunpack.c.l.b16 %v298
        %v635 = vunpack.c.h.b16 %v298
        %v636 = vunpack.c.l.b16 %v299
        %v637 = vunpack.c.h.b16 %v299
        %v638 = vunpack.c.l.b16 %v300
        %v639 = vunpack.c.h.b16 %v300
        %v640 = vunpack.c.l.b16 %v301
        %v641 = vunpack.c.h.b16 %v301
        %v642 = vunpack.c.l.b16 %v302
        %v643 = vunpack.c.h.b16 %v302
        %v644 = vunpack.c.l.b16 %v303
        %v645 = vunpack.c.h.b16 %v303
        %v646 = vunpack.c.l.b16 %v304
        %v647 = vunpack.c.h.b16 %v304
        %v648 = vunpack.c.l.b16 %v305
        %v649 = vunpack.c.h.b16 %v305
        %v650 = vunpack.c.l.b16 %v306
        %v651 = vunpack.c.h.b16 %v306
        %v652 = vunpack.c.l.b16 %v307
        %v653 = vunpack.c.h.b16 %v307
        %v654 = vunpack.c.l.b16 %v308
        %v655 = vunpack.c.h.b16 %v308
        %v656 = vunpack.c.l.b16 %v309
        %v657 = vunpack.c.h.b16 %v309
        %v658 = vunpack.c.l.b16 %v310
        %v659 = vunpack.c.h.b16 %v310
        %v660 = vunpack.c.l.b16 %v311
        %v661 = vunpack.c.h.b16 %v311
        %v662 = vunpack.c.l.b16 %v312
        %v663 = vunpack.c.h.b16 %v312
        %v664 = vunpack.c.l.b16 %v313
        %v665 = vunpack.c.h.b16 %v313
        %v666 = vunpack.c.l.b16 %v314
        %v667 = vunpack.c.h.b16 %v314
        %v668 = vunpack.c.l.b16 %v315
        %v669 = vunpack.c.h.b16 %v315
        %v670 = vunpack.c.l.b16 %v316
        %v671 = vunpack.c.h.b16 %v316
        %v672 = vunpack.c.l.b16 %v317
        %v673 = vunpack.c.h.b16 %v317
        %v674 = vunpack.c.l.b16 %v318
        %v675 = vunpack.c.h.b16 %v318
        %v676 = vunpack.c.l.b16 %v319
        %v677 = vunpack.c.h.b16 %v319
        %v678 = vunpack.c.l.b16 %v320
        %v679 = vunpack.c.h.b16 %v320
        %v680 = vunpack.c.l.b16 %v321
        %v681 = vunpack.c.h.b16 %v321
        %v682 = vunpack.c.l.b16 %v322
        %v683 = vunpack.c.h.b16 %v322
        %v684 = vunpack.c.l.b16 %v323
        %v685 = vunpack.c.h.b16 %v323
        %v686 = vunpack.c.l.b16 %v324
        %v687 = vunpack.c.h.b16 %v324
        %v688 = vunpack.c.l.b16 %v325
        %v689 = vunpack.c.h.b16 %v325
        %v690 = vunpack.c.l.b16 %v326
        %v691 = vunpack.c.h.b16 %v326
        %v692 = vunpack.c.l.b16 %v327
        %v693 = vunpack.c.h.b16 %v327
        %v694 = vunpack.c.l.b16 %v328
        %v695 = vunpack.c.h.b16 %v328
        %v696 = vunpack.c.l.b16 %v329
        %v697 = vunpack.c.h.b16 %v329
        %v698 = vunpack.c.l.b16 %v330
        %v699 = vunpack.c.h.b16 %v330
        %v700 = vunpack.c.l.b16 %v331
        %v701 = vunpack.c.h.b16 %v331
        %v702 = vunpack.c.l.b16 %v332
        %v703 = vunpack.c.h.b16 %v332
        %v704 = vunpack.c.l.b16 %v333
        %v705 = vunpack.c.h.b16 %v333
        %v706 = vunpack.c.l.b16 %v334
        %v707 = vunpack.c.h.b16 %v334
        %v708 = vunpack.c.l.b16 %v335
        %v709 = vunpack.c.h.b16 %v335
        %v710 = vunpack.c.l.b16 %v336
        %v711 = vunpack.c.h.b16 %v336
        %v712 = vunpack.c.l.b16 %v337
        %v713 = vunpack.c.h.b16 %v337
        %v714 = vunpack.c.l.b16 %v338
        %v715 = vunpack.c.h.b16 %v338
        %v716 = vunpack.c.l.b16 %v339
        %v717 = vunpack.c.h.b16 %v339
        %v718 = vunpack.c.l.b16 %v340
        %v719 = vunpack.c.h.b16 %v340
        %v720 = vunpack.c.l.b16 %v341
        %v721 = vunpack.c.h.b16 %v341
        %v722 = vunpack.c.l.b16 %v342
        %v723 = vunpack.c.h.b16 %v342
        %v724 = vunpack.c.l.b16 %v343
        %v725 = vunpack.c.h.b16 %v343
        %v726 = vunpack.c.l.b16 %v344
        %v727 = vunpack.c.h.b16 %v344
        %v728 = vunpack.c.l.b16 %v345
        %v729 = vunpack.c.h.b16 %v345
        %v730 = vunpack.c.l.b16 %v346
        %v731 = vunpack.c.h.b16 %v346
        %v732 = vunpack.c.l.b16 %v347
        %v733 = vunpack.c.h.b16 %v347
        %v734 = vunpack.c.l.b16 %v348
        %v735 = vunpack.c.h.b16 %v348
        %v736 = vunpack.c.l.b16 %v349
        %v737 = vunpack.c.h.b16 %v349
        %v738 = vunpack.c.l.b16 %v350
        %v739 = vunpack.c.h.b16 %v350
        %v740 = vunpack.c.l.b16 %v351
        %v741 = vunpack.c.h.b16 %v351
        %v742 = vunpack.c.l.b16 %v352
        %v743 = vunpack.c.h.b16 %v352
        %v744 = vunpack.c.l.b16 %v353
        %v745 = vunpack.c.h.b16 %v353
        %v746 = vunpack.c.l.b16 %v354
        %v747 = vunpack.c.h.b16 %v354
        %v748 = vunpack.c.l.b16 %v355
        %v749 = vunpack.c.h.b16 %v355
        %v750 = vpack.c.b16 %v498, %v494
        %v751 = vpack.c.b16 %v499, %v495
        %v752 = vpack.c.b16 %v500, %v496
        %v753 = vpack.c.b16 %v501, %v497
        %v754 = vpack.c.b16 %v506, %v502
        %v755 = vpack.c.b16 %v507, %v503
        %v756 = vpack.c.b16 %v508, %v504
        %v757 = vpack.c.b16 %v509, %v505
        %v758 = vpack.c.b16 %v514, %v510
        %v759 = vpack.c.b16 %v515, %v511
        %v760 = vpack.c.b16 %v516, %v512
        %v761 = vpack.c.b16 %v517, %v513
        %v762 = vpack.c.b16 %v522, %v518
        %v763 = vpack.c.b16 %v523, %v519
        %v764 = vpack.c.b16 %v524, %v520
        %v765 = vpack.c.b16 %v525, %v521
        %v766 = vpack.c.b16 %v530, %v526
        %v767 = vpack.c.b16 %v531, %v527
        %v768 = vpack.c.b16 %v532, %v528
        %v769 = vpack.c.b16 %v533, %v529
        %v770 = vpack.c.b16 %v538, %v534
        %v771 = vpack.c.b16 %v539, %v535
        %v772 = vpack.c.b16 %v540, %v536
        %v773 = vpack.c.b16 %v541, %v537
        %v774 = vpack.c.b16 %v546, %v542
        %v775 = vpack.c.b16 %v547, %v543
        %v776 = vpack.c.b16 %v548, %v544
        %v777 = vpack.c.b16 %v549, %v545
        %v778 = vpack.c.b16 %v554, %v550
        %v779 = vpack.c.b16 %v555, %v551
        %v780 = vpack.c.b16 %v556, %v552
        %v781 = vpack.c.b16 %v557, %v553
        %v782 = vpack.c.b16 %v562, %v558
        %v783 = vpack.c.b16 %v563, %v559
        %v784 = vpack.c.b16 %v564, %v560
        %v785 = vpack.c.b16 %v565, %v561
        %v786 = vpack.c.b16 %v570, %v566
        %v787 = vpack.c.b16 %v571, %v567
        %v788 = vpack.c.b16 %v572, %v568
        %v789 = vpack.c.b16 %v573, %v569
        %v790 = vpack.c.b16 %v578, %v574
        %v791 = vpack.c.b16 %v579, %v575
        %v792 = vpack.c.b16 %v580, %v576
        %v793 = vpack.c.b16 %v581, %v577
        %v794 = vpack.c.b16 %v586, %v582
        %v795 = vpack.c.b16 %v587, %v583
        %v796 = vpack.c.b16 %v588, %v584
        %v797 = vpack.c.b16 %v589, %v585
        %v798 = vpack.c.b16 %v594, %v590
        %v799 = vpack.c.b16 %v595, %v591
        %v800 = vpack.c.b16 %v596, %v592
        %v801 = vpack.c.b16 %v597, %v593
        %v802 = vpack.c.b16 %v602, %v598
        %v803 = vpack.c.b16 %v603, %v599
        %v804 = vpack.c.b16 %v604, %v600
        %v805 = vpack.c.b16 %v605, %v601
        %v806 = vpack.c.b16 %v610, %v606
        %v807 = vpack.c.b16 %v611, %v607
        %v808 = vpack.c.b16 %v612, %v608
        %v809 = vpack.c.b16 %v613, %v609
        %v810 = vpack.c.b16 %v618, %v614
        %v811 = vpack.c.b16 %v619, %v615
        %v812 = vpack.c.b16 %v620, %v616
        %v813 = vpack.c.b16 %v621, %v617
        %v814 = vpack.c.b16 %v626, %v622
        %v815 = vpack.c.b16 %v627, %v623
        %v816 = vpack.c.b16 %v628, %v624
        %v817 = vpack.c.b16 %v629, %v625
        %v818 = vpack.c.b16 %v634, %v630
        %v819 = vpack.c.b16 %v635, %v631
        %v820 = vpack.c.b16 %v636, %v632
        %v821 = vpack.c.b16 %v637, %v633
        %v822 = vpack.c.b16 %v642, %v638
        %v823 = vpack.c.b16 %v643, %v639
        %v824 = vpack.c.b16 %v644, %v640
        %v825 = vpack.c.b16 %v645, %v641
        %v826 = vpack.c.b16 %v650, %v646
        %v827 = vpack.c.b16 %v651, %v647
        %v828 = vpack.c.b16 %v652, %v648
        %v829 = vpack.c.b16 %v653, %v649
        %v830 = vpack.c.b16 %v658, %v654
        %v831 = vpack.c.b16 %v659, %v655
        %v832 = vpack.c.b16 %v660, %v656
        %v833 = vpack.c.b16 %v661, %v657
        %v834 = vpack.c.b16 %v666, %v662
        %v835 = vpack.c.b16 %v667, %v663
        %v836 = vpack.c.b16 %v668, %v664
        %v837 = vpack.c.b16 %v669, %v665
        %v838 = vpack.c.b16 %v674, %v670
        %v839 = vpack.c.b16 %v675, %v671
        %v840 = vpack.c.b16 %v676, %v672
        %v841 = vpack.c.b16 %v677, %v673
        %v842 = vpack.c.b16 %v682, %v678
        %v843 = vpack.c.b16 %v683, %v679
        %v844 = vpack.c.b16 %v684, %v680
        %v845 = vpack.c.b16 %v685, %v681
        %v846 = vpack.c.b16 %v690, %v686
        %v847 = vpack.c.b16 %v691, %v687
        %v848 = vpack.c.b16 %v692, %v688
        %v849 = vpack.c.b16 %v693, %v689
        %v850 = vpack.c.b16 %v698, %v694
        %v851 = vpack.c.b16 %v699, %v695
        %v852 = vpack.c.b16 %v700, %v696
        %v853 = vpack.c.b16 %v701, %v697
        %v854 = vpack.c.b16 %v706, %v702
        %v855 = vpack.c.b16 %v707, %v703
        %v856 = vpack.c.b16 %v708, %v704
        %v857 = vpack.c.b16 %v709, %v705
        %v858 = vpack.c.b16 %v714, %v710
        %v859 = vpack.c.b16 %v715, %v711
        %v860 = vpack.c.b16 %v716, %v712
        %v861 = vpack.c.b16 %v717, %v713
        %v862 = vpack.c.b16 %v722, %v718
        %v863 = vpack.c.b16 %v723, %v719
        %v864 = vpack.c.b16 %v724, %v720
        %v865 = vpack.c.b16 %v725, %v721
        %v866 = vpack.c.b16 %v730, %v726
        %v867 = vpack.c.b16 %v731, %v727
        %v868 = vpack.c.b16 %v732, %v728
        %v869 = vpack.c.b16 %v733, %v729
        %v870 = vpack.c.b16 %v738, %v734
        %v871 = vpack.c.b16 %v739, %v735
        %v872 = vpack.c.b16 %v740, %v736
        %v873 = vpack.c.b16 %v741, %v737
        %v874 = vpack.c.b16 %v746, %v742
        %v875 = vpack.c.b16 %v747, %v743
        %v876 = vpack.c.b16 %v748, %v744
        %v877 = vpack.c.b16 %v749, %v745
        %1006 = vmatpush.bf16.msra.mxu0 %v778
        %1007 = vmatpush.bf16.msra.mxu0 %v774
        %1008 = vmatpush.bf16.msra.mxu0 %v770
        %1009 = vmatpush.bf16.msra.mxu0 %v766
        %1010 = vmatpush.bf16.msra.mxu0 %v762
        %1011 = vmatpush.bf16.msra.mxu0 %v758
        %1012 = vmatpush.bf16.msra.mxu0 %v754
        %1013 = vmatpush.bf16.msra.mxu0 %v750
        %1014 = vmatmul.bf16.gmra.mxu0 %v224
        %v1015 = vpop.f32.mrf.mxu0
        %v1016 = vadd.f32 %v358, %v1015
        %v1017 = vpop.f32.mrf.mxu0
        %1018 = vdwg.mxu0
        %1019 = vmatpush.bf16.msra.mxu0 %v810
        %1020 = vmatpush.bf16.msra.mxu0 %v806
        %1021 = vmatpush.bf16.msra.mxu0 %v802
        %1022 = vmatpush.bf16.msra.mxu0 %v798
        %1023 = vmatpush.bf16.msra.mxu0 %v794
        %1024 = vmatpush.bf16.msra.mxu0 %v790
        %1025 = vmatpush.bf16.msra.mxu0 %v786
        %1026 = vmatpush.bf16.msra.mxu0 %v782
        %1027 = vmatmul.bf16.gmra.mxu0 %v225
        %v1028 = vpop.f32.mrf.mxu0
        %v1029 = vadd.f32 %v1016, %v1028
        %v1030 = vpop.f32.mrf.mxu0
        %1031 = vdwg.mxu0
        %1032 = vmatpush.bf16.msra.mxu0 %v842
        %1033 = vmatpush.bf16.msra.mxu0 %v838
        %1034 = vmatpush.bf16.msra.mxu0 %v834
        %1035 = vmatpush.bf16.msra.mxu0 %v830
        %1036 = vmatpush.bf16.msra.mxu0 %v826
        %1037 = vmatpush.bf16.msra.mxu0 %v822
        %1038 = vmatpush.bf16.msra.mxu0 %v818
        %1039 = vmatpush.bf16.msra.mxu0 %v814
        %1040 = vmatmul.bf16.gmra.mxu0 %v226
        %v1041 = vpop.f32.mrf.mxu0
        %v1042 = vadd.f32 %v1029, %v1041
        %v1043 = vpop.f32.mrf.mxu0
        %1044 = vdwg.mxu0
        %1045 = vmatpush.bf16.msra.mxu0 %v874
        %1046 = vmatpush.bf16.msra.mxu0 %v870
        %1047 = vmatpush.bf16.msra.mxu0 %v866
        %1048 = vmatpush.bf16.msra.mxu0 %v862
        %1049 = vmatpush.bf16.msra.mxu0 %v858
        %1050 = vmatpush.bf16.msra.mxu0 %v854
        %1051 = vmatpush.bf16.msra.mxu0 %v850
        %1052 = vmatpush.bf16.msra.mxu0 %v846
        %1053 = vmatmul.bf16.gmra.mxu0 %v227
        %v1054 = vpop.f32.mrf.mxu0
        %v1055 = vadd.f32 %v1042, %v1054
        %v1056 = vpop.f32.mrf.mxu0
        %1057 = vdwg.mxu0
        %1058 = vmatpush.bf16.msra.mxu0 %v779
        %1059 = vmatpush.bf16.msra.mxu0 %v775
        %1060 = vmatpush.bf16.msra.mxu0 %v771
        %1061 = vmatpush.bf16.msra.mxu0 %v767
        %1062 = vmatpush.bf16.msra.mxu0 %v763
        %1063 = vmatpush.bf16.msra.mxu0 %v759
        %1064 = vmatpush.bf16.msra.mxu0 %v755
        %1065 = vmatpush.bf16.msra.mxu0 %v751
        %1066 = vmatmul.bf16.gmra.mxu0 %v224
        %v1067 = vpop.f32.mrf.mxu0
        %v1068 = vadd.f32 %v359, %v1067
        %v1069 = vpop.f32.mrf.mxu0
        %1070 = vdwg.mxu0
        %1071 = vmatpush.bf16.msra.mxu0 %v811
        %1072 = vmatpush.bf16.msra.mxu0 %v807
        %1073 = vmatpush.bf16.msra.mxu0 %v803
        %1074 = vmatpush.bf16.msra.mxu0 %v799
        %1075 = vmatpush.bf16.msra.mxu0 %v795
        %1076 = vmatpush.bf16.msra.mxu0 %v791
        %1077 = vmatpush.bf16.msra.mxu0 %v787
        %1078 = vmatpush.bf16.msra.mxu0 %v783
        %1079 = vmatmul.bf16.gmra.mxu0 %v225
        %v1080 = vpop.f32.mrf.mxu0
        %v1081 = vadd.f32 %v1068, %v1080
        %v1082 = vpop.f32.mrf.mxu0
        %1083 = vdwg.mxu0
        %1084 = vmatpush.bf16.msra.mxu0 %v843
        %1085 = vmatpush.bf16.msra.mxu0 %v839
        %1086 = vmatpush.bf16.msra.mxu0 %v835
        %1087 = vmatpush.bf16.msra.mxu0 %v831
        %1088 = vmatpush.bf16.msra.mxu0 %v827
        %1089 = vmatpush.bf16.msra.mxu0 %v823
        %1090 = vmatpush.bf16.msra.mxu0 %v819
        %1091 = vmatpush.bf16.msra.mxu0 %v815
        %1092 = vmatmul.bf16.gmra.mxu0 %v226
        %v1093 = vpop.f32.mrf.mxu0
        %v1094 = vadd.f32 %v1081, %v1093
        %v1095 = vpop.f32.mrf.mxu0
        %1096 = vdwg.mxu0
        %1097 = vmatpush.bf16.msra.mxu0 %v875
        %1098 = vmatpush.bf16.msra.mxu0 %v871
        %1099 = vmatpush.bf16.msra.mxu0 %v867
        %1100 = vmatpush.bf16.msra.mxu0 %v863
        %1101 = vmatpush.bf16.msra.mxu0 %v859
        %1102 = vmatpush.bf16.msra.mxu0 %v855
        %1103 = vmatpush.bf16.msra.mxu0 %v851
        %1104 = vmatpush.bf16.msra.mxu0 %v847
        %1105 = vmatmul.bf16.gmra.mxu0 %v227
        %v1106 = vpop.f32.mrf.mxu0
        %v1107 = vadd.f32 %v1094, %v1106
        %v1108 = vpop.f32.mrf.mxu0
        %1109 = vdwg.mxu0
        %1110 = vmatpush.bf16.msra.mxu0 %v780
        %1111 = vmatpush.bf16.msra.mxu0 %v776
        %1112 = vmatpush.bf16.msra.mxu0 %v772
        %1113 = vmatpush.bf16.msra.mxu0 %v768
        %1114 = vmatpush.bf16.msra.mxu0 %v764
        %1115 = vmatpush.bf16.msra.mxu0 %v760
        %1116 = vmatpush.bf16.msra.mxu0 %v756
        %1117 = vmatpush.bf16.msra.mxu0 %v752
        %1118 = vmatmul.bf16.gmra.mxu0 %v224
        %v1119 = vpop.f32.mrf.mxu0
        %v1120 = vadd.f32 %v360, %v1119
        %v1121 = vpop.f32.mrf.mxu0
        %1122 = vdwg.mxu0
        %1123 = vmatpush.bf16.msra.mxu0 %v812
        %1124 = vmatpush.bf16.msra.mxu0 %v808
        %1125 = vmatpush.bf16.msra.mxu0 %v804
        %1126 = vmatpush.bf16.msra.mxu0 %v800
        %1127 = vmatpush.bf16.msra.mxu0 %v796
        %1128 = vmatpush.bf16.msra.mxu0 %v792
        %1129 = vmatpush.bf16.msra.mxu0 %v788
        %1130 = vmatpush.bf16.msra.mxu0 %v784
        %1131 = vmatmul.bf16.gmra.mxu0 %v225
        %v1132 = vpop.f32.mrf.mxu0
        %v1133 = vadd.f32 %v1120, %v1132
        %v1134 = vpop.f32.mrf.mxu0
        %1135 = vdwg.mxu0
        %1136 = vmatpush.bf16.msra.mxu0 %v844
        %1137 = vmatpush.bf16.msra.mxu0 %v840
        %1138 = vmatpush.bf16.msra.mxu0 %v836
        %1139 = vmatpush.bf16.msra.mxu0 %v832
        %1140 = vmatpush.bf16.msra.mxu0 %v828
        %1141 = vmatpush.bf16.msra.mxu0 %v824
        %1142 = vmatpush.bf16.msra.mxu0 %v820
        %1143 = vmatpush.bf16.msra.mxu0 %v816
        %1144 = vmatmul.bf16.gmra.mxu0 %v226
        %v1145 = vpop.f32.mrf.mxu0
        %v1146 = vadd.f32 %v1133, %v1145
        %v1147 = vpop.f32.mrf.mxu0
        %1148 = vdwg.mxu0
        %1149 = vmatpush.bf16.msra.mxu0 %v876
        %1150 = vmatpush.bf16.msra.mxu0 %v872
        %1151 = vmatpush.bf16.msra.mxu0 %v868
        %1152 = vmatpush.bf16.msra.mxu0 %v864
        %1153 = vmatpush.bf16.msra.mxu0 %v860
        %1154 = vmatpush.bf16.msra.mxu0 %v856
        %1155 = vmatpush.bf16.msra.mxu0 %v852
        %1156 = vmatpush.bf16.msra.mxu0 %v848
        %1157 = vmatmul.bf16.gmra.mxu0 %v227
        %v1158 = vpop.f32.mrf.mxu0
        %v1159 = vadd.f32 %v1146, %v1158
        %v1160 = vpop.f32.mrf.mxu0
        %1161 = vdwg.mxu0
        %1162 = vmatpush.bf16.msra.mxu0 %v781
        %1163 = vmatpush.bf16.msra.mxu0 %v777
        %1164 = vmatpush.bf16.msra.mxu0 %v773
        %1165 = vmatpush.bf16.msra.mxu0 %v769
        %1166 = vmatpush.bf16.msra.mxu0 %v765
        %1167 = vmatpush.bf16.msra.mxu0 %v761
        %1168 = vmatpush.bf16.msra.mxu0 %v757
        %1169 = vmatpush.bf16.msra.mxu0 %v753
        %1170 = vmatmul.bf16.gmra.mxu0 %v224
        %v1171 = vpop.f32.mrf.mxu0
        %v1172 = vadd.f32 %v361, %v1171
        %v1173 = vpop.f32.mrf.mxu0
        %1174 = vdwg.mxu0
        %1175 = vmatpush.bf16.msra.mxu0 %v813
        %1176 = vmatpush.bf16.msra.mxu0 %v809
        %1177 = vmatpush.bf16.msra.mxu0 %v805
        %1178 = vmatpush.bf16.msra.mxu0 %v801
        %1179 = vmatpush.bf16.msra.mxu0 %v797
        %1180 = vmatpush.bf16.msra.mxu0 %v793
        %1181 = vmatpush.bf16.msra.mxu0 %v789
        %1182 = vmatpush.bf16.msra.mxu0 %v785
        %1183 = vmatmul.bf16.gmra.mxu0 %v225
        %v1184 = vpop.f32.mrf.mxu0
        %v1185 = vadd.f32 %v1172, %v1184
        %v1186 = vpop.f32.mrf.mxu0
        %1187 = vdwg.mxu0
        %1188 = vmatpush.bf16.msra.mxu0 %v845
        %1189 = vmatpush.bf16.msra.mxu0 %v841
        %1190 = vmatpush.bf16.msra.mxu0 %v837
        %1191 = vmatpush.bf16.msra.mxu0 %v833
        %1192 = vmatpush.bf16.msra.mxu0 %v829
        %1193 = vmatpush.bf16.msra.mxu0 %v825
        %1194 = vmatpush.bf16.msra.mxu0 %v821
        %1195 = vmatpush.bf16.msra.mxu0 %v817
        %1196 = vmatmul.bf16.gmra.mxu0 %v226
        %v1197 = vpop.f32.mrf.mxu0
        %v1198 = vadd.f32 %v1185, %v1197
        %v1199 = vpop.f32.mrf.mxu0
        %1200 = vdwg.mxu0
        %1201 = vmatpush.bf16.msra.mxu0 %v877
        %1202 = vmatpush.bf16.msra.mxu0 %v873
        %1203 = vmatpush.bf16.msra.mxu0 %v869
        %1204 = vmatpush.bf16.msra.mxu0 %v865
        %1205 = vmatpush.bf16.msra.mxu0 %v861
        %1206 = vmatpush.bf16.msra.mxu0 %v857
        %1207 = vmatpush.bf16.msra.mxu0 %v853
        %1208 = vmatpush.bf16.msra.mxu0 %v849
        %1209 = vmatmul.bf16.gmra.mxu0 %v227
        %v1210 = vpop.f32.mrf.mxu0
        %v1211 = vadd.f32 %v1198, %v1210
        %v1212 = vpop.f32.mrf.mxu0
        %1213 = vdwg.mxu0
        %1214 = vst [vmem:[%s219] sm:$0xff] %v1055
        %1215 = vst [vmem:[%s219 + $0x8] sm:$0xff] %v1107
        %1216 = vst [vmem:[%s219 + $0x10] sm:$0xff] %v1159
        %1217 = vst [vmem:[%s219 + $0x18] sm:$0xff] %v1211
        %s1218 = sand.u32 %s97, 1
        %s1219 = scalar_lea.sflag [#allocation4], %s1218
        %s1220 = sand.u32 %s97, 1
        %s1221 = smul.addr %s1220, 32
        %s1222 = scalar_lea.vmem [#allocation8], %s1221
        // Predicated region
        $region45: #{tpu_custom_call.1} parent=31 // pred_check
          %p1223 = pneg %p107
        $region46: #{tpu_custom_call.1} parent=31 // pred_check_branch
          %1225 = sbr.rel (%p1223) target = $region48
        $region47: #{tpu_custom_call.1} parent=31 // pred_region
          %1227 = vsyncadd %s1219, 0
          %s1228 = smul.addr %s21, 4
          %s1229 = smul.addr %s1228, 8
          %s1230 = scalar_lea.hbm %s3, %s1229
          %s1232 = sshll.u32 %s1222, 4
          %s1233 = int_to_ptr.vmem [resolvable:$true] %s1232
          %s1234 = sshll.u32 %s1230, 4
          %s1235 = int_to_ptr.hbm [resolvable:$true] %s1234
          %1237 = dma.vmem_to_hbm [thread:$0]  %s1233, 512, %s1235, %s1219
        $region48: #{tpu_custom_call.1} parent=31 // pred_fallthru
          _
      $region32: #{tpu_custom_call.1} parent=5 // pred_fallthru
        _
      %p1238 = scmp.le.s32.totalorder 2, %s16
      // Predicated region
      $region49: #{tpu_custom_call.1} parent=5 // pred_check
        %p1239 = pneg %p1238
      $region50: #{tpu_custom_call.1} parent=5 // pred_check_branch
        %1241 = sbr.rel (%p1239) target = $region52
      $region51: #{tpu_custom_call.1} parent=5 // pred_region
        %s1242 = ssub.s32 %s16, 2
        // Predicated region
        $region53: #{tpu_custom_call.1} parent=51 // pred_check
          %p1243 = pneg %p113
        $region54: #{tpu_custom_call.1} parent=51 // pred_check_branch
          %1245 = sbr.rel (%p1243) target = $region56
        $region55: #{tpu_custom_call.1} parent=51 // pred_region
          %s1246 = sand.u32 %s98, 1
          %s1247 = scalar_lea.sflag [#allocation4], %s1246
          %s1248 = sand.u32 %s98, 1
          %s1249 = smul.addr %s1248, 32
          %s1250 = scalar_lea.vmem [#allocation8], %s1249
          %1252 = dma.done %s1247, 512
        $region56: #{tpu_custom_call.1} parent=51 // pred_fallthru
          _
      $region52: #{tpu_custom_call.1} parent=5 // pred_fallthru
        _
    $region6: #{tpu_custom_call.1} parent=1 // loop_footer
      %s20 = sadd.s32 1, %s16
    $region7: #{tpu_custom_call.1} parent=1 // loop_footer_branch
      %15 = sbr.rel target = $region3
    $region8: #{tpu_custom_call.1} parent=1 // loop_exit
      _
    %1253 = vsyncpa [#allocation3], 1
    %s1254 = scalar_lea.sflag [#allocation3], 1
    %1255 = vsyncpa %s1254, 1
    %1256 = vsyncpa [#allocation6], 1
    %1257 = vsyncpa [#allocation4], 1
    %s1258 = scalar_lea.sflag [#allocation4], 1
    %1259 = vsyncpa %s1258, 1

</llo_original>
